<compile_context>
chip_gen: v5e
topology: v5e:2x2
jax: 0.10.0
libtpu: 0.0.40
codegen_flags: <defaults>
</compile_context>

<pallas_src>
import functools

import jax
import jax.numpy as jnp
from jax.experimental import pallas as pl
from jax.experimental.pallas import tpu as pltpu


def _agg_sum_kernel(x_ref, out_ref, acc_ref, *,
                    tn, nkb, nkb_ps, front_pad, tail_pad, padded):
    """Accumulate the sequence-sum of one (TB, TN, H) tile into acc_ref.

    Grid = (nsplit, batch_tiles, seq_tiles_per_split); the output block is
    revisited across the last axis. Static kwargs:
      tn        sequence tile size
      nkb       total number of visited sequence blocks
      nkb_ps    visited sequence blocks per split (grid extent of axis 2)
      front_pad invalid rows at the front of the first visited block
      tail_pad  out-of-bounds rows at the end of the last visited block
      padded    whether nsplit * nkb_ps > nkb (clamped/skipped steps exist)
    """
    k = pl.program_id(2)
    gk = pl.program_id(0) * nkb_ps + k   # global visited-block index

    @pl.when(k == 0)
    def _init():
        acc_ref[...] = jnp.zeros_like(acc_ref)

    def accum(lo, hi):
        # lo/hi are Python ints -> static sublane slice, masked rows are
        # never read from VMEM into vregs.
        acc_ref[...] += jnp.sum(x_ref[:, lo:hi, :].astype(jnp.float32), axis=1)

    if nkb == 1:
        # Single visited sequence block: combined static front/tail slice.
        accum(front_pad, tn - tail_pad)
    else:
        valid = (gk < nkb) if padded else None

        conds = []
        if front_pad > 0:
            conds.append(("first", gk == 0))
        if tail_pad > 0:
            conds.append(("last", gk == nkb - 1))

        # Interior (full) blocks: plain unmasked accumulation.
        plain = None
        for _, c in conds:
            nc = jnp.logical_not(c)
            plain = nc if plain is None else (plain & nc)
        if valid is not None:
            plain = valid if plain is None else (plain & valid)

        if plain is None:
            accum(0, tn)
        else:
            pl.when(plain)(lambda: accum(0, tn))

        # Boundary blocks: static-slice the valid rows only.
        for name, c in conds:
            if name == "first":
                pl.when(c)(lambda: accum(front_pad, tn))
            else:
                pl.when(c)(lambda: accum(0, tn - tail_pad))

    @pl.when(k == nkb_ps - 1)
    def _finalize():
        out_ref[...] = acc_ref[...].astype(out_ref.dtype)


def aggregate_unclustered_sum(qs: jax.Array, n: int, *,
                              block_b: int | None = None,
                              block_n: int | None = None) -> jax.Array:
    """Pallas equivalent of AggregateUnclusteredSum.forward(qs, n).

    qs: [B, N, H] array.  n: Python int (static).
    Returns: [B, H] array == qs[:, n+1:].sum(axis=1).
    """
    B, N, H = qs.shape
    dtype = qs.dtype
    itemsize = jnp.dtype(dtype).itemsize

    # Python-slicing semantics of qs[:, n+1:] (matches PyTorch, incl. negative n).
    s = n + 1
    start = max(N + s, 0) if s < 0 else min(s, N)
    n_kept = N - start
    if n_kept <= 0:
        return jnp.zeros((B, H), dtype)

    # Packed sublane tile per dtype (8 rows f32, 16 bf16, 32 int8/fp8).
    sub = {4: 8, 2: 16, 1: 32}.get(itemsize, 8)

    # Batch tile: multiple of 8 (sublane-dense output stores) or the full batch.
    if block_b is not None:
        tb = max(1, min(block_b, B))
    else:
        tb = B if B <= 8 else 8
    if tb != B and tb % 8 != 0:
        tb = min(B, ((tb + 7) // 8) * 8)

    # Generation-aware block sizing: ~1/8 of VMEM per input block
    # (8 MiB on v7x's 64 MiB, 16 MiB on v5e/v6e's 128 MiB).
    try:
        vmem_cap = int(pltpu.get_tpu_info().vmem_capacity_bytes)
    except Exception:
        vmem_cap = 64 * 1024 * 1024          # conservative default (v7x)
    target_bytes = min(16 * 1024 * 1024, vmem_cap // 8)

    if block_n is not None:
        tn = int(block_n)
        if tn < N:
            tn = max(sub, (tn // sub) * sub)  # validate/round user value
    else:
        tn = target_bytes // max(1, tb * H * itemsize)
        tn = max(sub, (tn // sub) * sub)
        # Never make a block that is mostly masked prefix: cap by kept suffix.
        n_kept_rounded = ((n_kept + sub - 1) // sub) * sub
        tn = min(tn, n_kept_rounded)
    if tn >= N:
        tn = N

    kb0 = start // tn                 # first sequence block holding kept rows
    nkb = pl.cdiv(N, tn) - kb0        # number of sequence blocks actually visited
    nb = pl.cdiv(B, tb)
    front_pad = start - kb0 * tn      # masked rows at the front of visited block 0
    tail_pad = (kb0 + nkb) * tn - N   # OOB rows at the end of the last visited block

    # v7x dual-TensorCore: if the batch axis has a single tile, split the
    # visited sequence range over a leading size-2 "parallel" axis.
    nsplit = 2 if (nb == 1 and nkb >= 2) else 1
    nkb_ps = pl.cdiv(nkb, nsplit)
    padded = (nsplit * nkb_ps) != nkb

    kernel = functools.partial(
        _agg_sum_kernel, tn=tn, nkb=nkb, nkb_ps=nkb_ps,
        front_pad=front_pad, tail_pad=tail_pad, padded=padded)

    def x_map(sp, b, k):
        gk = sp * nkb_ps + k
        if padded:
            gk = jnp.minimum(gk, nkb - 1)   # clamp padded steps to a valid block
        return (b, kb0 + gk, 0)

    # VMEM limit: double-buffered input blocks + slack, bounded by capacity.
    block_bytes = tb * tn * H * itemsize
    vmem_limit = max(2 * block_bytes + (8 << 20), 32 << 20)
    vmem_limit = min(vmem_limit, (vmem_cap * 3) // 4, 96 << 20)

    grid_spec = pltpu.PrefetchScalarGridSpec(
        num_scalar_prefetch=0,
        grid=(nsplit, nb, nkb_ps),
        in_specs=[pl.BlockSpec((tb, tn, H), x_map)],
        out_specs=pl.BlockSpec((None, tb, H), lambda sp, b, k: (sp, b, 0)),
        scratch_shapes=[pltpu.VMEM((tb, H), jnp.float32)],
    )

    partial = pl.pallas_call(
        kernel,
        out_shape=jax.ShapeDtypeStruct((nsplit, B, H), jnp.float32),
        grid_spec=grid_spec,
        compiler_params=pltpu.CompilerParams(
            dimension_semantics=("parallel", "parallel", "arbitrary"),
            vmem_limit_bytes=int(vmem_limit),
        ),
    )(qs)

    # Tiny epilogue: combine the (at most 2) f32 partials and cast once.
    return jnp.sum(partial, axis=0).astype(dtype)


if __name__ == "__main__":
    key = jax.random.PRNGKey(0)
    key, k1, k2, k3, k4 = jax.random.split(key, 5)

    # Test 1: shapes implied by the module (batch=2, seq=8, hidden=32).
    # Single visited block, combined front slice (nkb == 1 path).
    B, N, H = 2, 8, 32
    n = 3
    qs = jax.random.normal(k1, (B, N, H), dtype=jnp.float32)
    out = jax.block_until_ready(aggregate_unclustered_sum(qs, n))
    ref = jnp.sum(qs[:, n + 1:, :], axis=1)
    assert out.shape == (B, H)
    assert jnp.allclose(out, ref, atol=1e-5, rtol=1e-5), "mismatch (test 1)"

    # Test 2: multi-tile sequence, front+tail static slices, dual-core split
    # with a padded (clamped/skipped) grid step.
    B2, N2, H2 = 3, 20, 128
    n2 = 6
    qs2 = jax.random.normal(k2, (B2, N2, H2), dtype=jnp.float32)
    out2 = jax.block_until_ready(aggregate_unclustered_sum(qs2, n2, block_n=8))
    ref2 = jnp.sum(qs2[:, n2 + 1:, :], axis=1)
    assert out2.shape == (B2, H2)
    assert jnp.allclose(out2, ref2, atol=1e-5, rtol=1e-5), "mismatch (test 2)"

    # Test 3: multiple batch tiles (nb=2, no sequence split), plain interior
    # blocks plus a front-boundary slice.
    B3, N3, H3 = 16, 64, 128
    n3 = 5
    qs3 = jax.random.normal(k3, (B3, N3, H3), dtype=jnp.float32)
    out3 = jax.block_until_ready(aggregate_unclustered_sum(qs3, n3, block_n=16))
    ref3 = jnp.sum(qs3[:, n3 + 1:, :], axis=1)
    assert out3.shape == (B3, H3)
    assert jnp.allclose(out3, ref3, atol=1e-4, rtol=1e-4), "mismatch (test 3)"

    # Test 4: bf16 input (dtype-aware sublane tile), negative n (full suffix),
    # sequence split with full (unsliced) blocks, f32 accumulation.
    B4, N4, H4 = 2, 48, 128
    n4 = -1
    qs4 = jax.random.normal(k4, (B4, N4, H4), dtype=jnp.float32).astype(jnp.bfloat16)
    out4 = jax.block_until_ready(aggregate_unclustered_sum(qs4, n4, block_n=16))
    ref4 = jnp.sum(qs4[:, n4 + 1:, :].astype(jnp.float32), axis=1).astype(jnp.bfloat16)
    assert out4.shape == (B4, H4)
    assert jnp.allclose(out4.astype(jnp.float32), ref4.astype(jnp.float32),
                        atol=1e-1, rtol=1e-2), "mismatch (test 4)"

    print("KERNEL_OK")
</pallas_src>

<mosaic_0001>
module attributes {stable_mosaic.version = 11 : i64} {
  func.func @_agg_sum_kernel(%arg0: i32, %arg1: i32, %arg2: i32, %arg3: memref<2x8x32xf32, #tpu.memory_space<vmem>>, %arg4: memref<1x2x32xf32, #tpu.memory_space<vmem>>, %arg5: memref<2x32xf32, #tpu.memory_space<vmem>>) attributes {dimension_semantics = [#tpu.dimension_semantics<parallel>, #tpu.dimension_semantics<parallel>, #tpu.dimension_semantics<arbitrary>], iteration_bounds = array<i64: 1, 1, 1>, scalar_prefetch = 0 : i64, scratch_operands = 1 : i64, tpu.core_type = #tpu.core_type<tc>, window_params = [{transform_indices = @transform_0, window_bounds = array<i64: 2, 8, 32>}, {transform_indices = @transform_1, window_bounds = array<i64: 1, 2, 32>}]} {
    %c0_i32 = arith.constant 0 : i32
    %0 = arith.cmpi eq, %arg2, %c0_i32 : i32
    %1 = arith.extui %0 : i1 to i32
    %c0_i32_0 = arith.constant 0 : i32
    %2 = arith.cmpi ne, %1, %c0_i32_0 : i32
    scf.if %2 {
      %cst_8 = arith.constant 0.000000e+00 : f32
      %11 = vector.broadcast %cst_8 : f32 to vector<2x32xf32>
      %c0_9 = arith.constant 0 : index
      %c0_10 = arith.constant 0 : index
      %12 = vector.load %arg5[%c0_9, %c0_10] : memref<2x32xf32, #tpu.memory_space<vmem>>, vector<2x32xf32>
      tpu.vector_store %arg5[%c0_9, %c0_10], %11 {strides = array<i32>} : memref<2x32xf32, #tpu.memory_space<vmem>>, vector<2x32xf32>,
    } else {
    }
    %c0 = arith.constant 0 : index
    %c0_1 = arith.constant 0 : index
    %3 = vector.load %arg5[%c0, %c0_1] : memref<2x32xf32, #tpu.memory_space<vmem>>, vector<2x32xf32>
    %c0_2 = arith.constant 0 : index
    %c4 = arith.constant 4 : index
    %c0_3 = arith.constant 0 : index
    %4 = vector.load %arg3[%c0_2, %c4, %c0_3] : memref<2x8x32xf32, #tpu.memory_space<vmem>>, vector<2x4x32xf32>
    %cst = arith.constant dense<0.000000e+00> : vector<2x32xf32>
    %5 = vector.multi_reduction <add>, %4, %cst [1] : vector<2x4x32xf32> to vector<2x32xf32>
    %6 = arith.addf %3, %5 : vector<2x32xf32>
    %c0_4 = arith.constant 0 : index
    %c0_5 = arith.constant 0 : index
    %7 = vector.load %arg5[%c0_4, %c0_5] : memref<2x32xf32, #tpu.memory_space<vmem>>, vector<2x32xf32>
    tpu.vector_store %arg5[%c0_4, %c0_5], %6 {strides = array<i32>} : memref<2x32xf32, #tpu.memory_space<vmem>>, vector<2x32xf32>,
    %c0_i32_6 = arith.constant 0 : i32
    %8 = arith.cmpi eq, %arg2, %c0_i32_6 : i32
    %9 = arith.extui %8 : i1 to i32
    %c0_i32_7 = arith.constant 0 : i32
    %10 = arith.cmpi ne, %9, %c0_i32_7 : i32
    scf.if %10 {
      %c0_8 = arith.constant 0 : index
      %c0_9 = arith.constant 0 : index
      %11 = vector.load %arg5[%c0_8, %c0_9] : memref<2x32xf32, #tpu.memory_space<vmem>>, vector<2x32xf32>
      %c0_10 = arith.constant 0 : index
      %c0_11 = arith.constant 0 : index
      %c0_12 = arith.constant 0 : index
      %12 = vector.load %arg4[%c0_10, %c0_11, %c0_12] : memref<1x2x32xf32, #tpu.memory_space<vmem>>, vector<1x2x32xf32>
      %13 = vector.shape_cast %12 : vector<1x2x32xf32> to vector<2x32xf32>
      %14 = vector.shape_cast %11 : vector<2x32xf32> to vector<1x2x32xf32>
      tpu.vector_store %arg4[%c0_10, %c0_11, %c0_12], %14 {strides = array<i32>} : memref<1x2x32xf32, #tpu.memory_space<vmem>>, vector<1x2x32xf32>,
    } else {
    }
    return
  }
  func.func @transform_0(%arg0: i32, %arg1: i32, %arg2: i32) -> (i32, i32, i32) {
    %c1_i32 = arith.constant 1 : i32
    %0 = arith.muli %arg0, %c1_i32 : i32
    %1 = arith.addi %0, %arg2 : i32
    %c0_i32 = arith.constant 0 : i32
    %2 = arith.addi %c0_i32, %1 : i32
    %c0_i32_0 = arith.constant 0 : i32
    %c0_i32_1 = arith.constant 0 : i32
    return %arg1, %2, %c0_i32_0 : i32, i32, i32
  }
  func.func @transform_1(%arg0: i32, %arg1: i32, %arg2: i32) -> (i32, i32, i32) {
    %c0_i32 = arith.constant 0 : i32
    %c0_i32_0 = arith.constant 0 : i32
    return %arg0, %arg1, %c0_i32 : i32, i32, i32
  }
}

</mosaic_0001>

<llo_original>
// kernel: tpu_custom_call.1
$region0: #{tpu_custom_call.1}
  #allocation0 [shape = 'u32[]', space=smem, size = 0x4, offset = 0x4, fixed_abs, tag = 'smem constant byte address 0x4 - core index']
  #allocation1 [shape = 'u32[72,128]{1,0:T(1,128)}', space=vmem, size = 0x9000, scoped, tag = 'internal scratch']
  #allocation2 [shape = 'f32[2,32]{1,0:T(2,128)}', space=vmem, size = 0x400, scoped, tag = 'scratch operand']
  %s0 = inlined_call_operand.hbm [shape: f32[2,8,32], index: 0, kind: input, shape index: {}]
  %s1 = inlined_call_operand.hbm [shape: f32[1,2,32], index: 1, kind: output, shape index: {}]
  %s2 = sld [smem:[#allocation0]]
  $region26: #{tpu_custom_call.1} parent=0
    _
  %s4 = ssub.s32 1, %s2
  %s5 = scalar_select 0, %s4, %s2
  $region1: #{tpu_custom_call.1} parent=0
    #allocation3 [shape = 'u8[8192]{0}', space=vmem, size = 0x2000, scoped, tag = 'input window, operand 0, single buffered']
    #allocation4 [shape = 's32[1]{0}', space=sflag, size = 0x4, scoped, tag = 'scoped memory for tpu_custom_call.1']
    #allocation5 [shape = 's32[1]{0}', space=sflag, size = 0x4, scoped, tag = 'scoped memory for tpu_custom_call.1']
    #allocation6 [shape = 'u8[1024]{0}', space=vmem, size = 0x400, scoped, tag = 'output window, operand 0, single buffered']
    %6 = vsyncpa [#allocation4], 0
    %7 = vsyncpa [#allocation5], 0
    // Predicated region
    $region2: #{tpu_custom_call.1} parent=1 // pred_check
      _
    $region3: #{tpu_custom_call.1} parent=1 // pred_check_branch
      %9 = sbr.rel (0) target = $region5
    $region4: #{tpu_custom_call.1} parent=1 // pred_region
      %s10 = sadd.s32 0, 0
      %12 = vsyncadd [#allocation4], 0
      %s13 = smul.addr %s10, 8
      %s14 = scalar_lea.hbm %s0, %s13
      %s15 = sshll.u32 %s14, 4
      %s16 = int_to_ptr.hbm [resolvable:$true] %s15
      %s17 = sshll.u32 [#allocation3], 4
      %s18 = int_to_ptr.vmem [resolvable:$true] %s17
      %23 = dma.hbm_to_vmem [thread:$0]  %s16, 256, %s18, [#allocation4], 128, 128, 8
    $region5: #{tpu_custom_call.1} parent=1 // pred_fallthru
      _
    // Predicated region
    $region6: #{tpu_custom_call.1} parent=1 // pred_check
      _
    $region7: #{tpu_custom_call.1} parent=1 // pred_check_branch
      %25 = sbr.rel (0) target = $region9
    $region8: #{tpu_custom_call.1} parent=1 // pred_region
      %27 = dma.done [#allocation4], 256
    $region9: #{tpu_custom_call.1} parent=1 // pred_fallthru
      _
    %s28 = sadd.s32 0, 0
    %p29 = scmp.eq.s32.totalorder 0, 0
    // Predicated region
    $region10: #{tpu_custom_call.1} parent=1 // pred_check
      %p30 = pneg %p29
    $region11: #{tpu_custom_call.1} parent=1 // pred_check_branch
      %32 = sbr.rel (%p30) target = $region13
    $region12: #{tpu_custom_call.1} parent=1 // pred_region
      %vm33 = vcmask 254976
      %34 = vst.msk [vmem:[#allocation2] sm:$0x3] %vm33, 0.0
    $region13: #{tpu_custom_call.1} parent=1 // pred_fallthru
      _
    %v35 = vld [vmem:[#allocation2] sm:$0x3]
    %v36 = vld [vmem:[#allocation3 + $0x4] sm:$0xf]
    %v37 = vld [vmem:[#allocation3 + $0xc] sm:$0xf]
    %vm38 = vcmask 257024
    %v39 = vsel %vm38, %v36, 0.0
    %v40 = vrot.slane %v39, 4
    %v41 = vadd.f32 %v39, %v40
    %v42 = vrot.slane %v41, 2
    %v43 = vadd.f32 %v41, %v42
    %v44 = vrot.slane %v43, 1
    %v45 = vadd.f32 %v43, %v44
    %v46 = vsel %vm38, %v37, 0.0
    %v47 = vrot.slane %v46, 4
    %v48 = vadd.f32 %v46, %v47
    %v49 = vrot.slane %v48, 2
    %v50 = vadd.f32 %v48, %v49
    %v51 = vrot.slane %v50, 1
    %v52 = vadd.f32 %v50, %v51
    %vm55 = vcmask 1041409
    %v56 = vsel %vm55, %v52, %v45
    %v58 = vadd.f32 %v35, %v56
    %vm59 = vcmask 254976
    %60 = vst.msk [vmem:[#allocation2] sm:$0x3] %vm59, %v58
    // Predicated region
    $region14: #{tpu_custom_call.1} parent=1 // pred_check
      %p61 = pneg %p29
    $region15: #{tpu_custom_call.1} parent=1 // pred_check_branch
      %63 = sbr.rel (%p61) target = $region17
    $region16: #{tpu_custom_call.1} parent=1 // pred_region
      %v64 = vld [vmem:[#allocation2] sm:$0x3]
      %65 = vst.msk [vmem:[#allocation6] sm:$0x3] %vm59, %v64
    $region17: #{tpu_custom_call.1} parent=1 // pred_fallthru
      _
    // Predicated region
    $region18: #{tpu_custom_call.1} parent=1 // pred_check
      _
    $region19: #{tpu_custom_call.1} parent=1 // pred_check_branch
      %67 = sbr.rel (0) target = $region21
    $region20: #{tpu_custom_call.1} parent=1 // pred_region
      %69 = vsyncadd [#allocation5], 0
      %s71 = sshll.u32 [#allocation6], 4
      %s72 = int_to_ptr.vmem [resolvable:$true] %s71
      %s73 = sshll.u32 %s1, 4
      %s74 = int_to_ptr.hbm [resolvable:$true] %s73
      %76 = dma.vmem_to_hbm [thread:$0]  %s72, 32, %s74, [#allocation5]
    $region21: #{tpu_custom_call.1} parent=1 // pred_fallthru
      _
    // Predicated region
    $region22: #{tpu_custom_call.1} parent=1 // pred_check
      _
    $region23: #{tpu_custom_call.1} parent=1 // pred_check_branch
      %78 = sbr.rel (0) target = $region25
    $region24: #{tpu_custom_call.1} parent=1 // pred_region
      %80 = dma.done [#allocation5], 32
    $region25: #{tpu_custom_call.1} parent=1 // pred_fallthru
      _
    %81 = vsyncpa [#allocation4], 1
    %82 = vsyncpa [#allocation5], 1

</llo_original>
